<compile_context>
chip_gen: v7x
topology: tpu7x:2x2x1
jax: 0.10.0
libtpu: 0.0.40
codegen_flags: <defaults>
</compile_context>

<pallas_src>
import functools

import jax
import jax.numpy as jnp
from jax.experimental import pallas as pl
from jax.experimental.pallas import tpu as pltpu


def _rgn_fused_kernel(nf_ref, init_ref, a_ref, mask_ref, *rest,
                      layer_meta, num_edge_types, num_node_types, use_concat):
    """All layers of the network, fused. Everything is VMEM-resident (small graphs)."""
    out_ref = rest[-1]
    wrefs = rest[:-1]
    E = num_edge_types
    T = num_node_types

    h = nf_ref[...].astype(jnp.float32)           # [N, D0] running hidden state (f32)
    a = a_ref[...]                                # [N, E*N] bf16 flattened adjacency
    mask = mask_ref[...].astype(jnp.float32)      # [N, T]   one-hot node-type mask
    init_bf = init_ref[...]                       # [N, D_init] bf16 (used iff use_concat)

    widx = 0
    for d_out, use_res in layer_meta:             # static unroll over layers
        wh_ref = wrefs[widx]; widx += 1           # [D_in,  (E+T)*D_out] bf16
        if use_concat:
            wi_ref = wrefs[widx]; widx += 1       # [D_init,(E+T)*D_out] bf16
        b_ref = wrefs[widx]; widx += 1            # [1,     (E+T)*D_out] f32

        # One fused projection for all edge types + node types (single MXU stream).
        p = jnp.dot(h.astype(jnp.bfloat16), wh_ref[...],
                    preferred_element_type=jnp.float32)
        if use_concat:
            p = p + jnp.dot(init_bf, wi_ref[...],
                            preferred_element_type=jnp.float32)
        p = p + b_ref[...]                        # biases (edge biases applied BEFORE aggregation)

        # Fused aggregation: sum_e A[e] @ msg_e  ==  A_flat @ vstack_e(msg_e), K = E*N.
        msg = jnp.concatenate(
            [p[:, e * d_out:(e + 1) * d_out] for e in range(E)], axis=0)   # [E*N, D_out]
        agg = jnp.dot(a, msg.astype(jnp.bfloat16),
                      preferred_element_type=jnp.float32)                  # [N, D_out]

        # Per-node-type self update: one-hot select of the node-type lane groups.
        upd = mask[:, 0:1] * p[:, E * d_out:(E + 1) * d_out]
        for t in range(1, T):
            upd = upd + mask[:, t:t + 1] * p[:, (E + t) * d_out:(E + t + 1) * d_out]

        h_new = jnp.maximum(upd + agg, 0.0)
        if use_res:
            h_new = h_new + h                     # residual = this layer's input node_feature
        h = h_new

    out_ref[...] = h.astype(out_ref.dtype)


def init_network_params(key, *, input_node_dim, hidden_node_dim, output_node_dim,
                        init_node_dim, num_hidden_layers, num_node_types,
                        num_edge_types, use_concat):
    """Deterministic synthetic parameters matching the module's per-layer shapes."""
    input_dims = [input_node_dim] + num_hidden_layers * [hidden_node_dim]
    output_dims = num_hidden_layers * [hidden_node_dim] + [output_node_dim]
    layers = []
    for d_in, d_out in zip(input_dims, output_dims):
        d = d_in + init_node_dim if use_concat else d_in
        key, k1, k2, k3, k4 = jax.random.split(key, 5)
        scale = 1.0 / jnp.sqrt(jnp.float32(d))
        layers.append(dict(
            w_edge=jax.random.normal(k1, (num_edge_types, d, d_out), jnp.float32) * scale,
            b_edge=jax.random.normal(k2, (num_edge_types, 1, d_out), jnp.float32) * 0.1,
            w_node=jax.random.normal(k3, (num_node_types, d, d_out), jnp.float32) * scale,
            b_node=jax.random.normal(k4, (num_node_types, 1, d_out), jnp.float32) * 0.1,
            residual_ok=(d_in == d_out),   # network enables residual only when dims match
        ))
    return layers


def prepare_network(layers, adjacency, node_type_mask, *, init_node_dim,
                    use_residual, use_concat):
    """One-time (per graph / per parameter set) restructuring for the fused kernel."""
    num_edge_types, n, _ = adjacency.shape
    num_node_types = node_type_mask.shape[0]

    # [E, N_dst, N_src] -> [N_dst, E*N_src] so sum_e A[e] @ msg_e becomes one matmul.
    a_flat = jnp.transpose(adjacency, (1, 0, 2)).reshape(n, num_edge_types * n)
    a_flat = a_flat.astype(jnp.bfloat16)                    # 0/1 exact in bf16

    # [T, N, 1] one-hot membership -> [N, T]
    mask_nt = jnp.transpose(node_type_mask[:, :, 0], (1, 0)).astype(jnp.float32)

    weights = []
    meta = []
    for p in layers:
        w_edge, b_edge = p["w_edge"], p["b_edge"]           # [E, D, Do], [E, 1, Do]
        w_node, b_node = p["w_node"], p["b_node"]           # [T, D, Do], [T, 1, Do]
        _, d_total, d_out = w_edge.shape

        # Stack along output lanes: edge-type groups first, then node-type groups.
        w_cat = jnp.concatenate([w_edge[e] for e in range(num_edge_types)]
                                + [w_node[t] for t in range(num_node_types)], axis=-1)
        b_cat = jnp.concatenate([b_edge[e] for e in range(num_edge_types)]
                                + [b_node[t] for t in range(num_node_types)], axis=-1)

        if use_concat:
            d_in = d_total - init_node_dim
            weights += [w_cat[:d_in].astype(jnp.bfloat16),   # applied to node_feature
                        w_cat[d_in:].astype(jnp.bfloat16),   # applied to init_node_feature
                        b_cat.astype(jnp.float32)]
        else:
            weights += [w_cat.astype(jnp.bfloat16),
                        b_cat.astype(jnp.float32)]
        meta.append((int(d_out), bool(use_residual and p["residual_ok"])))

    return dict(a_flat=a_flat, mask_nt=mask_nt, weights=weights, meta=tuple(meta),
                num_edge_types=num_edge_types, num_node_types=num_node_types,
                use_concat=use_concat)


def relational_graph_network(prep, node_feature, init_feature):
    """Single fused pallas_call for the whole layer stack."""
    n = node_feature.shape[0]
    d_out_final = prep["meta"][-1][0]

    kernel = functools.partial(
        _rgn_fused_kernel,
        layer_meta=prep["meta"],
        num_edge_types=prep["num_edge_types"],
        num_node_types=prep["num_node_types"],
        use_concat=prep["use_concat"],
    )
    vmem = pl.BlockSpec(memory_space=pltpu.MemorySpace.VMEM)
    inputs = [node_feature,
              init_feature.astype(jnp.bfloat16),
              prep["a_flat"],
              prep["mask_nt"],
              *prep["weights"]]
    return pl.pallas_call(
        kernel,
        out_shape=jax.ShapeDtypeStruct((n, d_out_final), node_feature.dtype),
        in_specs=[vmem] * len(inputs),
        out_specs=vmem,
    )(*inputs)


if __name__ == "__main__":
    key = jax.random.PRNGKey(0)

    # Small, module-consistent configuration.
    N = 8                      # number of graph nodes
    input_node_dim = 16
    hidden_node_dim = 32
    output_node_dim = 8
    init_node_dim = 8
    num_hidden_layers = 2
    node_types = [0, 1]        # 2 node types
    edge_types = [0, 1, 2]     # 3 edge types
    use_residual = True
    use_concat = True

    k_feat, k_init, k_adj, k_par = jax.random.split(key, 4)

    node_feature = jax.random.normal(k_feat, (N, input_node_dim), jnp.float32)
    init_node_feature = jax.random.normal(k_init, (N, init_node_dim), jnp.float32)

    # Dense 0/1 adjacency per edge type: [E, N_dst, N_src].
    adjacency = (jax.random.uniform(k_adj, (len(edge_types), N, N)) < 0.3).astype(jnp.float32)

    # One-hot node-type membership mask: [T, N, 1] (node i has type i % T).
    node_type_ids = jnp.arange(N) % len(node_types)
    node_type_mask = jnp.stack(
        [(node_type_ids == t).astype(jnp.float32)[:, None] for t in node_types], axis=0)

    params = init_network_params(
        k_par,
        input_node_dim=input_node_dim,
        hidden_node_dim=hidden_node_dim,
        output_node_dim=output_node_dim,
        init_node_dim=init_node_dim,
        num_hidden_layers=num_hidden_layers,
        num_node_types=len(node_types),
        num_edge_types=len(edge_types),
        use_concat=use_concat,
    )

    # One-time restructuring (weight stacking, adjacency flattening, bf16 casts).
    prep = prepare_network(params, adjacency, node_type_mask,
                           init_node_dim=init_node_dim,
                           use_residual=use_residual, use_concat=use_concat)

    out = relational_graph_network(prep, node_feature, init_node_feature)
    out = jax.block_until_ready(out)
    assert out.shape == (N, output_node_dim), out.shape

    print("KERNEL_OK")
</pallas_src>

<mosaic_0001>
module attributes {stable_mosaic.version = 11 : i64} {
  func.func @_rgn_fused_kernel(%arg0: memref<8x16xf32, #tpu.memory_space<vmem>>, %arg1: memref<8x8xbf16, #tpu.memory_space<vmem>>, %arg2: memref<8x24xbf16, #tpu.memory_space<vmem>>, %arg3: memref<8x2xf32, #tpu.memory_space<vmem>>, %arg4: memref<16x160xbf16, #tpu.memory_space<vmem>>, %arg5: memref<8x160xbf16, #tpu.memory_space<vmem>>, %arg6: memref<1x160xf32, #tpu.memory_space<vmem>>, %arg7: memref<32x160xbf16, #tpu.memory_space<vmem>>, %arg8: memref<8x160xbf16, #tpu.memory_space<vmem>>, %arg9: memref<1x160xf32, #tpu.memory_space<vmem>>, %arg10: memref<32x40xbf16, #tpu.memory_space<vmem>>, %arg11: memref<8x40xbf16, #tpu.memory_space<vmem>>, %arg12: memref<1x40xf32, #tpu.memory_space<vmem>>, %arg13: memref<8x8xf32, #tpu.memory_space<vmem>>) attributes {dimension_semantics = [], scalar_prefetch = 0 : i64, scratch_operands = 0 : i64, tpu.core_type = #tpu.core_type<tc>} {
    %c0 = arith.constant 0 : index
    %c0_0 = arith.constant 0 : index
    %0 = vector.load %arg0[%c0, %c0_0] : memref<8x16xf32, #tpu.memory_space<vmem>>, vector<8x16xf32>
    %c0_1 = arith.constant 0 : index
    %c0_2 = arith.constant 0 : index
    %1 = vector.load %arg2[%c0_1, %c0_2] : memref<8x24xbf16, #tpu.memory_space<vmem>>, vector<8x24xbf16>
    %c0_3 = arith.constant 0 : index
    %c0_4 = arith.constant 0 : index
    %2 = vector.load %arg3[%c0_3, %c0_4] : memref<8x2xf32, #tpu.memory_space<vmem>>, vector<8x2xf32>
    %c0_5 = arith.constant 0 : index
    %c0_6 = arith.constant 0 : index
    %3 = vector.load %arg1[%c0_5, %c0_6] : memref<8x8xbf16, #tpu.memory_space<vmem>>, vector<8x8xbf16>
    %4 = arith.truncf %0 : vector<8x16xf32> to vector<8x16xbf16>
    %c0_7 = arith.constant 0 : index
    %c0_8 = arith.constant 0 : index
    %5 = vector.load %arg4[%c0_7, %c0_8] : memref<16x160xbf16, #tpu.memory_space<vmem>>, vector<16x160xbf16>
    %cst = arith.constant dense<0.000000e+00> : vector<8x160xf32>
    %6 = tpu.matmul %4, %5, %cst {dimension_numbers = #tpu.dot_dimension_numbers<[1], [0], [0], [1], [0, 0, 1, 1], [], []>} : vector<8x16xbf16>, vector<16x160xbf16>, vector<8x160xf32> -> vector<8x160xf32>
    %c0_9 = arith.constant 0 : index
    %c0_10 = arith.constant 0 : index
    %7 = vector.load %arg5[%c0_9, %c0_10] : memref<8x160xbf16, #tpu.memory_space<vmem>>, vector<8x160xbf16>
    %cst_11 = arith.constant dense<0.000000e+00> : vector<8x160xf32>
    %8 = tpu.matmul %3, %7, %cst_11 {dimension_numbers = #tpu.dot_dimension_numbers<[1], [0], [0], [1], [0, 0, 1, 1], [], []>} : vector<8x8xbf16>, vector<8x160xbf16>, vector<8x160xf32> -> vector<8x160xf32>
    %9 = arith.addf %6, %8 : vector<8x160xf32>
    %c0_12 = arith.constant 0 : index
    %c0_13 = arith.constant 0 : index
    %10 = vector.load %arg6[%c0_12, %c0_13] : memref<1x160xf32, #tpu.memory_space<vmem>>, vector<1x160xf32>
    %11 = vector.broadcast %10 : vector<1x160xf32> to vector<8x160xf32>
    %12 = arith.addf %9, %11 : vector<8x160xf32>
    %13 = vector.extract_strided_slice %12 {offsets = [0, 0], sizes = [8, 32], strides = [1, 1]} : vector<8x160xf32> to vector<8x32xf32>
    %14 = vector.extract_strided_slice %12 {offsets = [0, 32], sizes = [8, 32], strides = [1, 1]} : vector<8x160xf32> to vector<8x32xf32>
    %15 = vector.extract_strided_slice %12 {offsets = [0, 64], sizes = [8, 32], strides = [1, 1]} : vector<8x160xf32> to vector<8x32xf32>
    %16 = tpu.concatenate %13, %14, %15 in 0 : vector<8x32xf32>, vector<8x32xf32>, vector<8x32xf32> -> vector<24x32xf32>
    %17 = arith.truncf %16 : vector<24x32xf32> to vector<24x32xbf16>
    %cst_14 = arith.constant dense<0.000000e+00> : vector<8x32xf32>
    %18 = tpu.matmul %1, %17, %cst_14 {dimension_numbers = #tpu.dot_dimension_numbers<[1], [0], [0], [1], [0, 0, 1, 1], [], []>} : vector<8x24xbf16>, vector<24x32xbf16>, vector<8x32xf32> -> vector<8x32xf32>
    %19 = vector.extract_strided_slice %2 {offsets = [0, 0], sizes = [8, 1], strides = [1, 1]} : vector<8x2xf32> to vector<8x1xf32>
    %20 = vector.extract_strided_slice %12 {offsets = [0, 96], sizes = [8, 32], strides = [1, 1]} : vector<8x160xf32> to vector<8x32xf32>
    %21 = vector.broadcast %19 : vector<8x1xf32> to vector<8x32xf32>
    %22 = arith.mulf %21, %20 : vector<8x32xf32>
    %23 = vector.extract_strided_slice %2 {offsets = [0, 1], sizes = [8, 1], strides = [1, 1]} : vector<8x2xf32> to vector<8x1xf32>
    %24 = vector.extract_strided_slice %12 {offsets = [0, 128], sizes = [8, 32], strides = [1, 1]} : vector<8x160xf32> to vector<8x32xf32>
    %25 = vector.broadcast %23 : vector<8x1xf32> to vector<8x32xf32>
    %26 = arith.mulf %25, %24 : vector<8x32xf32>
    %27 = arith.addf %22, %26 : vector<8x32xf32>
    %28 = arith.addf %27, %18 : vector<8x32xf32>
    %cst_15 = arith.constant 0.000000e+00 : f32
    %29 = vector.broadcast %cst_15 : f32 to vector<8x32xf32>
    %30 = arith.maximumf %28, %29 : vector<8x32xf32>
    %31 = arith.truncf %30 : vector<8x32xf32> to vector<8x32xbf16>
    %c0_16 = arith.constant 0 : index
    %c0_17 = arith.constant 0 : index
    %32 = vector.load %arg7[%c0_16, %c0_17] : memref<32x160xbf16, #tpu.memory_space<vmem>>, vector<32x160xbf16>
    %cst_18 = arith.constant dense<0.000000e+00> : vector<8x160xf32>
    %33 = tpu.matmul %31, %32, %cst_18 {dimension_numbers = #tpu.dot_dimension_numbers<[1], [0], [0], [1], [0, 0, 1, 1], [], []>} : vector<8x32xbf16>, vector<32x160xbf16>, vector<8x160xf32> -> vector<8x160xf32>
    %c0_19 = arith.constant 0 : index
    %c0_20 = arith.constant 0 : index
    %34 = vector.load %arg8[%c0_19, %c0_20] : memref<8x160xbf16, #tpu.memory_space<vmem>>, vector<8x160xbf16>
    %cst_21 = arith.constant dense<0.000000e+00> : vector<8x160xf32>
    %35 = tpu.matmul %3, %34, %cst_21 {dimension_numbers = #tpu.dot_dimension_numbers<[1], [0], [0], [1], [0, 0, 1, 1], [], []>} : vector<8x8xbf16>, vector<8x160xbf16>, vector<8x160xf32> -> vector<8x160xf32>
    %36 = arith.addf %33, %35 : vector<8x160xf32>
    %c0_22 = arith.constant 0 : index
    %c0_23 = arith.constant 0 : index
    %37 = vector.load %arg9[%c0_22, %c0_23] : memref<1x160xf32, #tpu.memory_space<vmem>>, vector<1x160xf32>
    %38 = vector.broadcast %37 : vector<1x160xf32> to vector<8x160xf32>
    %39 = arith.addf %36, %38 : vector<8x160xf32>
    %40 = vector.extract_strided_slice %39 {offsets = [0, 0], sizes = [8, 32], strides = [1, 1]} : vector<8x160xf32> to vector<8x32xf32>
    %41 = vector.extract_strided_slice %39 {offsets = [0, 32], sizes = [8, 32], strides = [1, 1]} : vector<8x160xf32> to vector<8x32xf32>
    %42 = vector.extract_strided_slice %39 {offsets = [0, 64], sizes = [8, 32], strides = [1, 1]} : vector<8x160xf32> to vector<8x32xf32>
    %43 = tpu.concatenate %40, %41, %42 in 0 : vector<8x32xf32>, vector<8x32xf32>, vector<8x32xf32> -> vector<24x32xf32>
    %44 = arith.truncf %43 : vector<24x32xf32> to vector<24x32xbf16>
    %cst_24 = arith.constant dense<0.000000e+00> : vector<8x32xf32>
    %45 = tpu.matmul %1, %44, %cst_24 {dimension_numbers = #tpu.dot_dimension_numbers<[1], [0], [0], [1], [0, 0, 1, 1], [], []>} : vector<8x24xbf16>, vector<24x32xbf16>, vector<8x32xf32> -> vector<8x32xf32>
    %46 = vector.extract_strided_slice %2 {offsets = [0, 0], sizes = [8, 1], strides = [1, 1]} : vector<8x2xf32> to vector<8x1xf32>
    %47 = vector.extract_strided_slice %39 {offsets = [0, 96], sizes = [8, 32], strides = [1, 1]} : vector<8x160xf32> to vector<8x32xf32>
    %48 = vector.broadcast %46 : vector<8x1xf32> to vector<8x32xf32>
    %49 = arith.mulf %48, %47 : vector<8x32xf32>
    %50 = vector.extract_strided_slice %2 {offsets = [0, 1], sizes = [8, 1], strides = [1, 1]} : vector<8x2xf32> to vector<8x1xf32>
    %51 = vector.extract_strided_slice %39 {offsets = [0, 128], sizes = [8, 32], strides = [1, 1]} : vector<8x160xf32> to vector<8x32xf32>
    %52 = vector.broadcast %50 : vector<8x1xf32> to vector<8x32xf32>
    %53 = arith.mulf %52, %51 : vector<8x32xf32>
    %54 = arith.addf %49, %53 : vector<8x32xf32>
    %55 = arith.addf %54, %45 : vector<8x32xf32>
    %cst_25 = arith.constant 0.000000e+00 : f32
    %56 = vector.broadcast %cst_25 : f32 to vector<8x32xf32>
    %57 = arith.maximumf %55, %56 : vector<8x32xf32>
    %58 = arith.addf %57, %30 : vector<8x32xf32>
    %59 = arith.truncf %58 : vector<8x32xf32> to vector<8x32xbf16>
    %c0_26 = arith.constant 0 : index
    %c0_27 = arith.constant 0 : index
    %60 = vector.load %arg10[%c0_26, %c0_27] : memref<32x40xbf16, #tpu.memory_space<vmem>>, vector<32x40xbf16>
    %cst_28 = arith.constant dense<0.000000e+00> : vector<8x40xf32>
    %61 = tpu.matmul %59, %60, %cst_28 {dimension_numbers = #tpu.dot_dimension_numbers<[1], [0], [0], [1], [0, 0, 1, 1], [], []>} : vector<8x32xbf16>, vector<32x40xbf16>, vector<8x40xf32> -> vector<8x40xf32>
    %c0_29 = arith.constant 0 : index
    %c0_30 = arith.constant 0 : index
    %62 = vector.load %arg11[%c0_29, %c0_30] : memref<8x40xbf16, #tpu.memory_space<vmem>>, vector<8x40xbf16>
    %cst_31 = arith.constant dense<0.000000e+00> : vector<8x40xf32>
    %63 = tpu.matmul %3, %62, %cst_31 {dimension_numbers = #tpu.dot_dimension_numbers<[1], [0], [0], [1], [0, 0, 1, 1], [], []>} : vector<8x8xbf16>, vector<8x40xbf16>, vector<8x40xf32> -> vector<8x40xf32>
    %64 = arith.addf %61, %63 : vector<8x40xf32>
    %c0_32 = arith.constant 0 : index
    %c0_33 = arith.constant 0 : index
    %65 = vector.load %arg12[%c0_32, %c0_33] : memref<1x40xf32, #tpu.memory_space<vmem>>, vector<1x40xf32>
    %66 = vector.broadcast %65 : vector<1x40xf32> to vector<8x40xf32>
    %67 = arith.addf %64, %66 : vector<8x40xf32>
    %68 = vector.extract_strided_slice %67 {offsets = [0, 0], sizes = [8, 8], strides = [1, 1]} : vector<8x40xf32> to vector<8x8xf32>
    %69 = vector.extract_strided_slice %67 {offsets = [0, 8], sizes = [8, 8], strides = [1, 1]} : vector<8x40xf32> to vector<8x8xf32>
    %70 = vector.extract_strided_slice %67 {offsets = [0, 16], sizes = [8, 8], strides = [1, 1]} : vector<8x40xf32> to vector<8x8xf32>
    %71 = tpu.concatenate %68, %69, %70 in 0 : vector<8x8xf32>, vector<8x8xf32>, vector<8x8xf32> -> vector<24x8xf32>
    %72 = arith.truncf %71 : vector<24x8xf32> to vector<24x8xbf16>
    %cst_34 = arith.constant dense<0.000000e+00> : vector<8x8xf32>
    %73 = tpu.matmul %1, %72, %cst_34 {dimension_numbers = #tpu.dot_dimension_numbers<[1], [0], [0], [1], [0, 0, 1, 1], [], []>} : vector<8x24xbf16>, vector<24x8xbf16>, vector<8x8xf32> -> vector<8x8xf32>
    %74 = vector.extract_strided_slice %2 {offsets = [0, 0], sizes = [8, 1], strides = [1, 1]} : vector<8x2xf32> to vector<8x1xf32>
    %75 = vector.extract_strided_slice %67 {offsets = [0, 24], sizes = [8, 8], strides = [1, 1]} : vector<8x40xf32> to vector<8x8xf32>
    %76 = vector.broadcast %74 : vector<8x1xf32> to vector<8x8xf32>
    %77 = arith.mulf %76, %75 : vector<8x8xf32>
    %78 = vector.extract_strided_slice %2 {offsets = [0, 1], sizes = [8, 1], strides = [1, 1]} : vector<8x2xf32> to vector<8x1xf32>
    %79 = vector.extract_strided_slice %67 {offsets = [0, 32], sizes = [8, 8], strides = [1, 1]} : vector<8x40xf32> to vector<8x8xf32>
    %80 = vector.broadcast %78 : vector<8x1xf32> to vector<8x8xf32>
    %81 = arith.mulf %80, %79 : vector<8x8xf32>
    %82 = arith.addf %77, %81 : vector<8x8xf32>
    %83 = arith.addf %82, %73 : vector<8x8xf32>
    %cst_35 = arith.constant 0.000000e+00 : f32
    %84 = vector.broadcast %cst_35 : f32 to vector<8x8xf32>
    %85 = arith.maximumf %83, %84 : vector<8x8xf32>
    %c0_36 = arith.constant 0 : index
    %c0_37 = arith.constant 0 : index
    %86 = vector.load %arg13[%c0_36, %c0_37] : memref<8x8xf32, #tpu.memory_space<vmem>>, vector<8x8xf32>
    tpu.vector_store %arg13[%c0_36, %c0_37], %85 {strides = array<i32>} : memref<8x8xf32, #tpu.memory_space<vmem>>, vector<8x8xf32>,
    return
  }
}

</mosaic_0001>

<llo_original>
// kernel: tpu_custom_call.1
$region0: #{tpu_custom_call.1}
  #allocation0 [shape = 'u32[]', space=smem, size = 0x4, offset = 0x4, fixed_abs, tag = 'smem constant byte address 0x4 - core index']
  #allocation1 [shape = 'u32[144,128]{1,0:T(1,128)}', space=vmem, size = 0x12000, scoped, tag = 'internal scratch']
  %s0 = inlined_call_operand.hbm [shape: f32[8,16], index: 0, kind: input, shape index: {}]
  %s1 = inlined_call_operand.hbm [shape: bf16[8,8], index: 1, kind: input, shape index: {}]
  %s2 = inlined_call_operand.hbm [shape: bf16[8,24], index: 2, kind: input, shape index: {}]
  %s3 = inlined_call_operand.vmem [shape: f32[8,2], index: 3, kind: input, shape index: {}]
  %s4 = inlined_call_operand.hbm [shape: bf16[16,160], index: 4, kind: input, shape index: {}]
  %s5 = inlined_call_operand.hbm [shape: bf16[8,160], index: 5, kind: input, shape index: {}]
  %s6 = inlined_call_operand.hbm [shape: f32[1,160], index: 6, kind: input, shape index: {}]
  %s7 = inlined_call_operand.vmem [shape: bf16[32,160], index: 7, kind: input, shape index: {}]
  %s8 = inlined_call_operand.vmem [shape: bf16[8,160], index: 8, kind: input, shape index: {}]
  %s9 = inlined_call_operand.hbm [shape: f32[1,160], index: 9, kind: input, shape index: {}]
  %s10 = inlined_call_operand.hbm [shape: bf16[32,40], index: 10, kind: input, shape index: {}]
  %s11 = inlined_call_operand.vmem [shape: bf16[8,40], index: 11, kind: input, shape index: {}]
  %s12 = inlined_call_operand.vmem [shape: f32[1,40], index: 12, kind: input, shape index: {}]
  %s13 = inlined_call_operand.hbm [shape: f32[8,8], index: 13, kind: output, shape index: {}]
  %s14 = sld [smem:[#allocation0]]
  $region94: #{tpu_custom_call.1} parent=0
    _
  %s16 = ssub.s32 1, %s14
  %s17 = scalar_select 0, %s16, %s14
  $region1: #{tpu_custom_call.1} parent=0
    #allocation2 [shape = 'u8[4096]{0}', space=vmem, size = 0x1000, scoped, tag = 'input window, operand 0, single buffered']
    #allocation3 [shape = 's32[1]{0}', space=sflag, size = 0x4, scoped, tag = 'scoped memory for tpu_custom_call.1']
    #allocation4 [shape = 's32[1]{0}', space=sflag, size = 0x4, scoped, tag = 'scoped memory for tpu_custom_call.1']
    #allocation5 [shape = 'u8[2048]{0}', space=vmem, size = 0x800, scoped, tag = 'input window, operand 1, single buffered']
    #allocation6 [shape = 's32[1]{0}', space=sflag, size = 0x4, scoped, tag = 'scoped memory for tpu_custom_call.1']
    #allocation7 [shape = 'u8[2048]{0}', space=vmem, size = 0x800, scoped, tag = 'input window, operand 2, single buffered']
    #allocation8 [shape = 'u8[8192]{0}', space=vmem, size = 0x2000, scoped, tag = 'input window, operand 4, single buffered']
    #allocation9 [shape = 's32[1]{0}', space=sflag, size = 0x4, scoped, tag = 'scoped memory for tpu_custom_call.1']
    #allocation10 [shape = 'u8[4096]{0}', space=vmem, size = 0x1000, scoped, tag = 'input window, operand 5, single buffered']
    #allocation11 [shape = 'u8[1024]{0}', space=vmem, size = 0x400, scoped, tag = 'input window, operand 6, single buffered']
    #allocation12 [shape = 's32[1]{0}', space=sflag, size = 0x4, scoped, tag = 'scoped memory for tpu_custom_call.1']
    #allocation13 [shape = 'u8[1024]{0}', space=vmem, size = 0x400, scoped, tag = 'input window, operand 9, single buffered']
    #allocation14 [shape = 'u8[8192]{0}', space=vmem, size = 0x2000, scoped, tag = 'input window, operand 10, single buffered']
    #allocation15 [shape = 's32[1]{0}', space=sflag, size = 0x4, scoped, tag = 'scoped memory for tpu_custom_call.1']
    #allocation16 [shape = 'u8[4096]{0}', space=vmem, size = 0x1000, scoped, tag = 'output window, operand 0, single buffered']
    %18 = vsyncpa [#allocation3], 0
    %19 = vsyncpa [#allocation6], 0
    %20 = vsyncpa [#allocation9], 0
    %21 = vsyncpa [#allocation12], 0
    %22 = vsyncpa [#allocation15], 0
    %23 = vsyncpa [#allocation4], 0
    // Predicated region
    $region2: #{tpu_custom_call.1} parent=1 // pred_check
      _
    $region3: #{tpu_custom_call.1} parent=1 // pred_check_branch
      %25 = sbr.rel (0) target = $region5
    $region4: #{tpu_custom_call.1} parent=1 // pred_region
      %s27 = ssub.s32 128, 128
      %28 = vsyncadd [#allocation3], %s27
      %s30 = sshll.u32 [#allocation2], 4
      %s31 = int_to_ptr.vmem [resolvable:$true] %s30
      %33 = dma.hbm_to_vmem [thread:$0]  %s0, 128, %s31, [#allocation3]
    $region5: #{tpu_custom_call.1} parent=1 // pred_fallthru
      _
    // Predicated region
    $region6: #{tpu_custom_call.1} parent=1 // pred_check
      _
    $region7: #{tpu_custom_call.1} parent=1 // pred_check_branch
      %35 = sbr.rel (0) target = $region9
    $region8: #{tpu_custom_call.1} parent=1 // pred_region
      %s37 = ssub.s32 64, 64
      %38 = vsyncadd [#allocation6], %s37
      %s40 = sshll.u32 [#allocation5], 4
      %s41 = int_to_ptr.vmem [resolvable:$true] %s40
      %43 = dma.hbm_to_vmem [thread:$0]  %s1, 64, %s41, [#allocation6]
    $region9: #{tpu_custom_call.1} parent=1 // pred_fallthru
      _
    // Predicated region
    $region10: #{tpu_custom_call.1} parent=1 // pred_check
      _
    $region11: #{tpu_custom_call.1} parent=1 // pred_check_branch
      %45 = sbr.rel (0) target = $region13
    $region12: #{tpu_custom_call.1} parent=1 // pred_region
      %s47 = ssub.s32 64, 64
      %48 = vsyncadd [#allocation6], %s47
      %s50 = sshll.u32 [#allocation7], 4
      %s51 = int_to_ptr.vmem [resolvable:$true] %s50
      %53 = dma.hbm_to_vmem [thread:$0]  %s2, 64, %s51, [#allocation6]
    $region13: #{tpu_custom_call.1} parent=1 // pred_fallthru
      _
    // Predicated region
    $region14: #{tpu_custom_call.1} parent=1 // pred_check
      _
    $region15: #{tpu_custom_call.1} parent=1 // pred_check_branch
      %55 = sbr.rel (0) target = $region17
    $region16: #{tpu_custom_call.1} parent=1 // pred_region
      _
    $region17: #{tpu_custom_call.1} parent=1 // pred_fallthru
      _
    // Predicated region
    $region18: #{tpu_custom_call.1} parent=1 // pred_check
      _
    $region19: #{tpu_custom_call.1} parent=1 // pred_check_branch
      %57 = sbr.rel (0) target = $region21
    $region20: #{tpu_custom_call.1} parent=1 // pred_region
      %s59 = ssub.s32 256, 256
      %60 = vsyncadd [#allocation9], %s59
      %s61 = sshll.u32 [#allocation8], 4
      %s62 = int_to_ptr.vmem [resolvable:$true] %s61
      %67 = dma.hbm_to_vmem [thread:$0]  %s4, 256, %s62, [#allocation9], 128, 128, 8
    $region21: #{tpu_custom_call.1} parent=1 // pred_fallthru
      _
    // Predicated region
    $region22: #{tpu_custom_call.1} parent=1 // pred_check
      _
    $region23: #{tpu_custom_call.1} parent=1 // pred_check_branch
      %69 = sbr.rel (0) target = $region25
    $region24: #{tpu_custom_call.1} parent=1 // pred_region
      %s71 = ssub.s32 128, 128
      %72 = vsyncadd [#allocation9], %s71
      %s74 = sshll.u32 [#allocation10], 4
      %s75 = int_to_ptr.vmem [resolvable:$true] %s74
      %77 = dma.hbm_to_vmem [thread:$0]  %s5, 128, %s75, [#allocation9]
    $region25: #{tpu_custom_call.1} parent=1 // pred_fallthru
      _
    // Predicated region
    $region26: #{tpu_custom_call.1} parent=1 // pred_check
      _
    $region27: #{tpu_custom_call.1} parent=1 // pred_check_branch
      %79 = sbr.rel (0) target = $region29
    $region28: #{tpu_custom_call.1} parent=1 // pred_region
      %s81 = ssub.s32 32, 32
      %82 = vsyncadd [#allocation12], %s81
      %s84 = sshll.u32 [#allocation11], 4
      %s85 = int_to_ptr.vmem [resolvable:$true] %s84
      %87 = dma.hbm_to_vmem [thread:$0]  %s6, 32, %s85, [#allocation12]
    $region29: #{tpu_custom_call.1} parent=1 // pred_fallthru
      _
    // Predicated region
    $region30: #{tpu_custom_call.1} parent=1 // pred_check
      _
    $region31: #{tpu_custom_call.1} parent=1 // pred_check_branch
      %89 = sbr.rel (0) target = $region33
    $region32: #{tpu_custom_call.1} parent=1 // pred_region
      _
    $region33: #{tpu_custom_call.1} parent=1 // pred_fallthru
      _
    // Predicated region
    $region34: #{tpu_custom_call.1} parent=1 // pred_check
      _
    $region35: #{tpu_custom_call.1} parent=1 // pred_check_branch
      %91 = sbr.rel (0) target = $region37
    $region36: #{tpu_custom_call.1} parent=1 // pred_region
      _
    $region37: #{tpu_custom_call.1} parent=1 // pred_fallthru
      _
    // Predicated region
    $region38: #{tpu_custom_call.1} parent=1 // pred_check
      _
    $region39: #{tpu_custom_call.1} parent=1 // pred_check_branch
      %93 = sbr.rel (0) target = $region41
    $region40: #{tpu_custom_call.1} parent=1 // pred_region
      %s95 = ssub.s32 32, 32
      %96 = vsyncadd [#allocation12], %s95
      %s98 = sshll.u32 [#allocation13], 4
      %s99 = int_to_ptr.vmem [resolvable:$true] %s98
      %101 = dma.hbm_to_vmem [thread:$0]  %s9, 32, %s99, [#allocation12]
    $region41: #{tpu_custom_call.1} parent=1 // pred_fallthru
      _
    // Predicated region
    $region42: #{tpu_custom_call.1} parent=1 // pred_check
      _
    $region43: #{tpu_custom_call.1} parent=1 // pred_check_branch
      %103 = sbr.rel (0) target = $region45
    $region44: #{tpu_custom_call.1} parent=1 // pred_region
      %s105 = ssub.s32 256, 256
      %106 = vsyncadd [#allocation15], %s105
      %s107 = sshll.u32 [#allocation14], 4
      %s108 = int_to_ptr.vmem [resolvable:$true] %s107
      %113 = dma.hbm_to_vmem [thread:$0]  %s10, 256, %s108, [#allocation15], 64, 64, 4
    $region45: #{tpu_custom_call.1} parent=1 // pred_fallthru
      _
    // Predicated region
    $region46: #{tpu_custom_call.1} parent=1 // pred_check
      _
    $region47: #{tpu_custom_call.1} parent=1 // pred_check_branch
      %115 = sbr.rel (0) target = $region49
    $region48: #{tpu_custom_call.1} parent=1 // pred_region
      _
    $region49: #{tpu_custom_call.1} parent=1 // pred_fallthru
      _
    // Predicated region
    $region50: #{tpu_custom_call.1} parent=1 // pred_check
      _
    $region51: #{tpu_custom_call.1} parent=1 // pred_check_branch
      %117 = sbr.rel (0) target = $region53
    $region52: #{tpu_custom_call.1} parent=1 // pred_region
      _
    $region53: #{tpu_custom_call.1} parent=1 // pred_fallthru
      _
    // Predicated region
    $region54: #{tpu_custom_call.1} parent=1 // pred_check
      _
    $region55: #{tpu_custom_call.1} parent=1 // pred_check_branch
      %119 = sbr.rel (0) target = $region57
    $region56: #{tpu_custom_call.1} parent=1 // pred_region
      %120 = dma.done [#allocation3], 128
    $region57: #{tpu_custom_call.1} parent=1 // pred_fallthru
      _
    // Predicated region
    $region58: #{tpu_custom_call.1} parent=1 // pred_check
      _
    $region59: #{tpu_custom_call.1} parent=1 // pred_check_branch
      %122 = sbr.rel (0) target = $region61
    $region60: #{tpu_custom_call.1} parent=1 // pred_region
      %123 = dma.done [#allocation6], 64
    $region61: #{tpu_custom_call.1} parent=1 // pred_fallthru
      _
    // Predicated region
    $region62: #{tpu_custom_call.1} parent=1 // pred_check
      _
    $region63: #{tpu_custom_call.1} parent=1 // pred_check_branch
      %125 = sbr.rel (0) target = $region65
    $region64: #{tpu_custom_call.1} parent=1 // pred_region
      %126 = dma.done [#allocation6], 64
    $region65: #{tpu_custom_call.1} parent=1 // pred_fallthru
      _
    // Predicated region
    $region66: #{tpu_custom_call.1} parent=1 // pred_check
      _
    $region67: #{tpu_custom_call.1} parent=1 // pred_check_branch
      %128 = sbr.rel (0) target = $region69
    $region68: #{tpu_custom_call.1} parent=1 // pred_region
      %129 = dma.done [#allocation9], 256
    $region69: #{tpu_custom_call.1} parent=1 // pred_fallthru
      _
    // Predicated region
    $region70: #{tpu_custom_call.1} parent=1 // pred_check
      _
    $region71: #{tpu_custom_call.1} parent=1 // pred_check_branch
      %131 = sbr.rel (0) target = $region73
    $region72: #{tpu_custom_call.1} parent=1 // pred_region
      %132 = dma.done [#allocation9], 128
    $region73: #{tpu_custom_call.1} parent=1 // pred_fallthru
      _
    // Predicated region
    $region74: #{tpu_custom_call.1} parent=1 // pred_check
      _
    $region75: #{tpu_custom_call.1} parent=1 // pred_check_branch
      %134 = sbr.rel (0) target = $region77
    $region76: #{tpu_custom_call.1} parent=1 // pred_region
      %135 = dma.done [#allocation12], 32
    $region77: #{tpu_custom_call.1} parent=1 // pred_fallthru
      _
    // Predicated region
    $region78: #{tpu_custom_call.1} parent=1 // pred_check
      _
    $region79: #{tpu_custom_call.1} parent=1 // pred_check_branch
      %137 = sbr.rel (0) target = $region81
    $region80: #{tpu_custom_call.1} parent=1 // pred_region
      %138 = dma.done [#allocation12], 32
    $region81: #{tpu_custom_call.1} parent=1 // pred_fallthru
      _
    // Predicated region
    $region82: #{tpu_custom_call.1} parent=1 // pred_check
      _
    $region83: #{tpu_custom_call.1} parent=1 // pred_check_branch
      %140 = sbr.rel (0) target = $region85
    $region84: #{tpu_custom_call.1} parent=1 // pred_region
      %141 = dma.done [#allocation15], 256
    $region85: #{tpu_custom_call.1} parent=1 // pred_fallthru
      _
    %v143 = vld [vmem:[#allocation2] sm:$0xff]
    %v144 = vld [vmem:[#allocation7] sm:$0xf]
    %v145 = vld [vmem:[%s3] sm:$0xff]
    %v146 = vld [vmem:[#allocation5] sm:$0xf]
    %v147 = vpack.c.bf16 %v143, %v143
    %v148 = vld [vmem:[#allocation8] sm:$0xff]
    %v149 = vld [vmem:[#allocation8 + $0x8] sm:$0xff]
    %v150 = vld [vmem:[#allocation10] sm:$0xff]
    %v152 = vunpack.c.l.b16 %v150
    %v153 = vunpack.c.h.b16 %v150
    %v154 = vpack.c.b16 %v152, %v152
    %v155 = vpack.c.b16 %v153, %v153
    %vm156 = vcmask 64512
    %v158 = vsel %vm156, %v146, 0
    %vm160 = vcmask 1043456
    %v162 = vsel %vm160, %v154, 0
    %v165 = vsel %vm160, %v155, 0
    %167 = vmatprep.subr.bf16.mxu0 %v165
    %168 = vmatpush1.bf16.msra.mxu0 %v162
    %169 = vmatprep.subr.bf16.mxu0 0
    %170 = vmatpush1.bf16.msra.mxu0 0
    %171 = vmatprep.subr.bf16.mxu0 0
    %172 = vmatpush1.bf16.msra.mxu0 0
    %173 = vmatprep.subr.bf16.mxu0 0
    %174 = vmatpush1.bf16.msra.mxu0 0
    %175 = vmatprep.subr.bf16.mxu0 0
    %176 = vmatpush1.bf16.msra.mxu0 0
    %177 = vmatprep.subr.bf16.mxu0 0
    %178 = vmatpush1.bf16.msra.mxu0 0
    %179 = vmatprep.subr.bf16.mxu0 0
    %180 = vmatpush1.bf16.msra.mxu0 0
    %181 = vmatprep.subr.bf16.mxu0 0
    %182 = vmatpush1.bf16.msra.mxu0 0
    %183 = vmatprep.subr.bf16.mxu0 0
    %184 = vmatpush1.bf16.msra.mxu0 0
    %185 = vmatprep.subr.bf16.mxu0 0
    %186 = vmatpush1.bf16.msra.mxu0 0
    %187 = vmatprep.subr.bf16.mxu0 0
    %188 = vmatpush1.bf16.msra.mxu0 0
    %189 = vmatprep.subr.bf16.mxu0 0
    %190 = vmatpush1.bf16.msra.mxu0 0
    %191 = vmatprep.subr.bf16.mxu0 0
    %192 = vmatpush1.bf16.msra.mxu0 0
    %193 = vmatprep.subr.bf16.mxu0 0
    %194 = vmatpush1.bf16.msra.mxu0 0
    %195 = vmatprep.subr.bf16.mxu0 0
    %196 = vmatpush1.bf16.msra.mxu0 0
    %197 = vmatprep.subr.bf16.mxu0 0
    %198 = vmatpush1.bf16.msra.mxu0 0
    %199 = vmatprep.mubr.bf16.mxu0 0
    %200 = vmatmul.mubr.bf16.gmra.mrb[0].mxu0 %v158
    %v201 = vpop.f32.mrb[0].mxu0
    %v202 = vadd.f32 0.0, %v201
    %v203 = vpop.f32.mrb[0].mxu0
    %v204 = vadd.f32 0.0, %v203
    %v205 = vpop.f32.mrb[0].mxu0
    %v206 = vpop.f32.mrb[0].mxu0
    %207 = vdwg.mxu0
    %v210 = vunpack.c.l.b16 %v148
    %v211 = vunpack.c.h.b16 %v148
    %v212 = vunpack.c.l.b16 %v149
    %v213 = vunpack.c.h.b16 %v149
    %v214 = vpack.c.b16 %v212, %v210
    %v215 = vpack.c.b16 %v213, %v211
    %vm218 = vcmask 130048
    %v220 = vsel %vm218, %v147, 0
    %222 = vmatprep.subr.bf16.mxu0 %v215
    %223 = vmatpush1.bf16.msra.mxu0 %v214
    %224 = vmatprep.subr.bf16.mxu0 0
    %225 = vmatpush1.bf16.msra.mxu0 0
    %226 = vmatprep.subr.bf16.mxu0 0
    %227 = vmatpush1.bf16.msra.mxu0 0
    %228 = vmatprep.subr.bf16.mxu0 0
    %229 = vmatpush1.bf16.msra.mxu0 0
    %230 = vmatprep.subr.bf16.mxu0 0
    %231 = vmatpush1.bf16.msra.mxu0 0
    %232 = vmatprep.subr.bf16.mxu0 0
    %233 = vmatpush1.bf16.msra.mxu0 0
    %234 = vmatprep.subr.bf16.mxu0 0
    %235 = vmatpush1.bf16.msra.mxu0 0
    %236 = vmatprep.subr.bf16.mxu0 0
    %237 = vmatpush1.bf16.msra.mxu0 0
    %238 = vmatprep.subr.bf16.mxu0 0
    %239 = vmatpush1.bf16.msra.mxu0 0
    %240 = vmatprep.subr.bf16.mxu0 0
    %241 = vmatpush1.bf16.msra.mxu0 0
    %242 = vmatprep.subr.bf16.mxu0 0
    %243 = vmatpush1.bf16.msra.mxu0 0
    %244 = vmatprep.subr.bf16.mxu0 0
    %245 = vmatpush1.bf16.msra.mxu0 0
    %246 = vmatprep.subr.bf16.mxu0 0
    %247 = vmatpush1.bf16.msra.mxu0 0
    %248 = vmatprep.subr.bf16.mxu0 0
    %249 = vmatpush1.bf16.msra.mxu0 0
    %250 = vmatprep.subr.bf16.mxu0 0
    %251 = vmatpush1.bf16.msra.mxu0 0
    %252 = vmatprep.subr.bf16.mxu0 0
    %253 = vmatpush1.bf16.msra.mxu0 0
    %254 = vmatprep.mubr.bf16.mxu0 0
    %255 = vmatmul.mubr.bf16.gmra.mrb[0].mxu0 %v220
    %v256 = vpop.f32.mrb[0].mxu0
    %v257 = vadd.f32 %v202, %v256
    %v258 = vpop.f32.mrb[0].mxu0
    %v259 = vadd.f32 %v204, %v258
    %v260 = vpop.f32.mrb[0].mxu0
    %v261 = vpop.f32.mrb[0].mxu0
    %262 = vdwg.mxu0
    %v263 = vld [vmem:[#allocation11] sm:$0x3]
    %v265 = vlaneseq
    %v266 = vshrl.u32 %v265, 7
    %v267 = vsub.s32 0, %v266
    %v268 = vrot.slane %v263, %v267
    %v269 = vlaneseq
    %v270 = vshrl.u32 %v269, 7
    %v271 = vsub.s32 1, %v270
    %v272 = vrot.slane %v263, %v271
    %v275 = vadd.f32 %v257, %v268
    %v276 = vadd.f32 %v259, %v272
    %278 = vrot.lane.b32.xlu0 %v275, 96
    %v279 = vpop.permute.xlu0 %278
    %281 = vrot.lane.b32.xlu0 %v275, 64
    %v282 = vpop.permute.xlu0 %281
    %v284 = vpack.c.bf16 %v279, %v275
    %v285 = vpack.c.bf16 %v282, %v282
    %vm286 = vcmask 195584
    %v288 = vsel %vm286, %v144, 0
    %v291 = vsel %vm160, %v285, 0
    %293 = vmatprep.subr.bf16.mxu0 0
    %294 = vmatpush1.bf16.msra.mxu0 %v284
    %295 = vmatprep.subr.bf16.mxu0 0
    %296 = vmatpush1.bf16.msra.mxu0 %v291
    %297 = vmatprep.subr.bf16.mxu0 0
    %298 = vmatpush1.bf16.msra.mxu0 0
    %299 = vmatprep.subr.bf16.mxu0 0
    %300 = vmatpush1.bf16.msra.mxu0 0
    %301 = vmatprep.subr.bf16.mxu0 0
    %302 = vmatpush1.bf16.msra.mxu0 0
    %303 = vmatprep.subr.bf16.mxu0 0
    %304 = vmatpush1.bf16.msra.mxu0 0
    %305 = vmatprep.subr.bf16.mxu0 0
    %306 = vmatpush1.bf16.msra.mxu0 0
    %307 = vmatprep.subr.bf16.mxu0 0
    %308 = vmatpush1.bf16.msra.mxu0 0
    %309 = vmatprep.subr.bf16.mxu0 0
    %310 = vmatpush1.bf16.msra.mxu0 0
    %311 = vmatprep.subr.bf16.mxu0 0
    %312 = vmatpush1.bf16.msra.mxu0 0
    %313 = vmatprep.subr.bf16.mxu0 0
    %314 = vmatpush1.bf16.msra.mxu0 0
    %315 = vmatprep.subr.bf16.mxu0 0
    %316 = vmatpush1.bf16.msra.mxu0 0
    %317 = vmatprep.subr.bf16.mxu0 0
    %318 = vmatpush1.bf16.msra.mxu0 0
    %319 = vmatprep.subr.bf16.mxu0 0
    %320 = vmatpush1.bf16.msra.mxu0 0
    %321 = vmatprep.subr.bf16.mxu0 0
    %322 = vmatpush1.bf16.msra.mxu0 0
    %323 = vmatprep.subr.bf16.mxu0 0
    %324 = vmatpush1.bf16.msra.mxu0 0
    %325 = vmatprep.mubr.bf16.mxu0 0
    %326 = vmatmul.mubr.bf16.gmra.mrb[0].mxu0 %v288
    %v327 = vpop.f32.mrb[0].mxu0
    %v328 = vadd.f32 0.0, %v327
    %v329 = vpop.f32.mrb[0].mxu0
    %v330 = vpop.f32.mrb[0].mxu0
    %v331 = vpop.f32.mrb[0].mxu0
    %332 = vdwg.mxu0
    %334 = vset.pattern.permute.xlu0 0
    %335 = vperm.xlu0 %334, %v145
    %v336 = vpop.permute.xlu0 %335
    %v338 = vmul.f32 %v336, %v275
    %339 = vset.pattern.permute.xlu0 1
    %340 = vperm.xlu0 %339, %v145
    %v341 = vpop.permute.xlu0 %340
    %v343 = vmul.f32 %v341, %v276
    %345 = vrot.lane.b32.xlu0 %v343, 96
    %v346 = vpop.permute.xlu0 %345
    %v348 = vadd.f32 %v338, %v346
    %350 = vrot.lane.b32.xlu0 %v328, 96
    %v351 = vpop.permute.xlu0 %350
    %v353 = vadd.f32 %v348, %v351
    %v354 = vmax.f32 %v353, 0.0
    %v355 = vpack.c.bf16 %v354, %v354
    %v356 = vld [vmem:[%s7] sm:$0xff]
    %v357 = vld [vmem:[%s7 + $0x8] sm:$0xff]
    %v358 = vld [vmem:[%s7 + $0x10] sm:$0xff]
    %v359 = vld [vmem:[%s7 + $0x18] sm:$0xff]
    %v360 = vld [vmem:[%s8] sm:$0xff]
    %v362 = vunpack.c.l.b16 %v360
    %v363 = vunpack.c.h.b16 %v360
    %v364 = vpack.c.b16 %v362, %v362
    %v365 = vpack.c.b16 %v363, %v363
    %v367 = vsel %vm160, %v364, 0
    %v370 = vsel %vm160, %v365, 0
    %372 = vmatprep.subr.bf16.mxu0 %v370
    %373 = vmatpush1.bf16.msra.mxu0 %v367
    %374 = vmatprep.subr.bf16.mxu0 0
    %375 = vmatpush1.bf16.msra.mxu0 0
    %376 = vmatprep.subr.bf16.mxu0 0
    %377 = vmatpush1.bf16.msra.mxu0 0
    %378 = vmatprep.subr.bf16.mxu0 0
    %379 = vmatpush1.bf16.msra.mxu0 0
    %380 = vmatprep.subr.bf16.mxu0 0
    %381 = vmatpush1.bf16.msra.mxu0 0
    %382 = vmatprep.subr.bf16.mxu0 0
    %383 = vmatpush1.bf16.msra.mxu0 0
    %384 = vmatprep.subr.bf16.mxu0 0
    %385 = vmatpush1.bf16.msra.mxu0 0
    %386 = vmatprep.subr.bf16.mxu0 0
    %387 = vmatpush1.bf16.msra.mxu0 0
    %388 = vmatprep.subr.bf16.mxu0 0
    %389 = vmatpush1.bf16.msra.mxu0 0
    %390 = vmatprep.subr.bf16.mxu0 0
    %391 = vmatpush1.bf16.msra.mxu0 0
    %392 = vmatprep.subr.bf16.mxu0 0
    %393 = vmatpush1.bf16.msra.mxu0 0
    %394 = vmatprep.subr.bf16.mxu0 0
    %395 = vmatpush1.bf16.msra.mxu0 0
    %396 = vmatprep.subr.bf16.mxu0 0
    %397 = vmatpush1.bf16.msra.mxu0 0
    %398 = vmatprep.subr.bf16.mxu0 0
    %399 = vmatpush1.bf16.msra.mxu0 0
    %400 = vmatprep.subr.bf16.mxu0 0
    %401 = vmatpush1.bf16.msra.mxu0 0
    %402 = vmatprep.subr.bf16.mxu0 0
    %403 = vmatpush1.bf16.msra.mxu0 0
    %404 = vmatprep.mubr.bf16.mxu0 0
    %405 = vmatmul.mubr.bf16.gmra.mrb[0].mxu0 %v158
    %v406 = vpop.f32.mrb[0].mxu0
    %v407 = vadd.f32 0.0, %v406
    %v408 = vpop.f32.mrb[0].mxu0
    %v409 = vadd.f32 0.0, %v408
    %v410 = vpop.f32.mrb[0].mxu0
    %v411 = vpop.f32.mrb[0].mxu0
    %412 = vdwg.mxu0
    %414 = vrot.lane.b32.xlu0 %v355, 32
    %v415 = vpop.permute.xlu0 %414
    %v420 = vunpack.c.l.b16 %v356
    %v421 = vunpack.c.h.b16 %v356
    %v422 = vunpack.c.l.b16 %v357
    %v423 = vunpack.c.h.b16 %v357
    %v424 = vunpack.c.l.b16 %v358
    %v425 = vunpack.c.h.b16 %v358
    %v426 = vunpack.c.l.b16 %v359
    %v427 = vunpack.c.h.b16 %v359
    %v428 = vpack.c.b16 %v422, %v420
    %v429 = vpack.c.b16 %v423, %v421
    %v430 = vpack.c.b16 %v426, %v424
    %v431 = vpack.c.b16 %v427, %v425
    %vm436 = vcmask 261120
    %v438 = vsel %vm436, %v415, 0
    %440 = vmatprep.subr.bf16.mxu0 %v429
    %441 = vmatpush1.bf16.msra.mxu0 %v428
    %442 = vmatprep.subr.bf16.mxu0 %v431
    %443 = vmatpush1.bf16.msra.mxu0 %v430
    %444 = vmatprep.subr.bf16.mxu0 0
    %445 = vmatpush1.bf16.msra.mxu0 0
    %446 = vmatprep.subr.bf16.mxu0 0
    %447 = vmatpush1.bf16.msra.mxu0 0
    %448 = vmatprep.subr.bf16.mxu0 0
    %449 = vmatpush1.bf16.msra.mxu0 0
    %450 = vmatprep.subr.bf16.mxu0 0
    %451 = vmatpush1.bf16.msra.mxu0 0
    %452 = vmatprep.subr.bf16.mxu0 0
    %453 = vmatpush1.bf16.msra.mxu0 0
    %454 = vmatprep.subr.bf16.mxu0 0
    %455 = vmatpush1.bf16.msra.mxu0 0
    %456 = vmatprep.subr.bf16.mxu0 0
    %457 = vmatpush1.bf16.msra.mxu0 0
    %458 = vmatprep.subr.bf16.mxu0 0
    %459 = vmatpush1.bf16.msra.mxu0 0
    %460 = vmatprep.subr.bf16.mxu0 0
    %461 = vmatpush1.bf16.msra.mxu0 0
    %462 = vmatprep.subr.bf16.mxu0 0
    %463 = vmatpush1.bf16.msra.mxu0 0
    %464 = vmatprep.subr.bf16.mxu0 0
    %465 = vmatpush1.bf16.msra.mxu0 0
    %466 = vmatprep.subr.bf16.mxu0 0
    %467 = vmatpush1.bf16.msra.mxu0 0
    %468 = vmatprep.subr.bf16.mxu0 0
    %469 = vmatpush1.bf16.msra.mxu0 0
    %470 = vmatprep.subr.bf16.mxu0 0
    %471 = vmatpush1.bf16.msra.mxu0 0
    %472 = vmatprep.mubr.bf16.mxu0 0
    %473 = vmatmul.mubr.bf16.gmra.mrb[0].mxu0 %v438
    %v474 = vpop.f32.mrb[0].mxu0
    %v475 = vadd.f32 %v407, %v474
    %v476 = vpop.f32.mrb[0].mxu0
    %v477 = vadd.f32 %v409, %v476
    %v478 = vpop.f32.mrb[0].mxu0
    %v479 = vpop.f32.mrb[0].mxu0
    %480 = vdwg.mxu0
    %v481 = vld [vmem:[#allocation13] sm:$0x3]
    %v483 = vlaneseq
    %v484 = vshrl.u32 %v483, 7
    %v485 = vsub.s32 0, %v484
    %v486 = vrot.slane %v481, %v485
    %v487 = vlaneseq
    %v488 = vshrl.u32 %v487, 7
    %v489 = vsub.s32 1, %v488
    %v490 = vrot.slane %v481, %v489
    %v493 = vadd.f32 %v475, %v486
    %v494 = vadd.f32 %v477, %v490
    %496 = vrot.lane.b32.xlu0 %v493, 96
    %v497 = vpop.permute.xlu0 %496
    %499 = vrot.lane.b32.xlu0 %v493, 64
    %v500 = vpop.permute.xlu0 %499
    %v502 = vpack.c.bf16 %v497, %v493
    %v503 = vpack.c.bf16 %v500, %v500
    %v505 = vsel %vm160, %v503, 0
    %507 = vmatprep.subr.bf16.mxu0 0
    %508 = vmatpush1.bf16.msra.mxu0 %v502
    %509 = vmatprep.subr.bf16.mxu0 0
    %510 = vmatpush1.bf16.msra.mxu0 %v505
    %511 = vmatprep.subr.bf16.mxu0 0
    %512 = vmatpush1.bf16.msra.mxu0 0
    %513 = vmatprep.subr.bf16.mxu0 0
    %514 = vmatpush1.bf16.msra.mxu0 0
    %515 = vmatprep.subr.bf16.mxu0 0
    %516 = vmatpush1.bf16.msra.mxu0 0
    %517 = vmatprep.subr.bf16.mxu0 0
    %518 = vmatpush1.bf16.msra.mxu0 0
    %519 = vmatprep.subr.bf16.mxu0 0
    %520 = vmatpush1.bf16.msra.mxu0 0
    %521 = vmatprep.subr.bf16.mxu0 0
    %522 = vmatpush1.bf16.msra.mxu0 0
    %523 = vmatprep.subr.bf16.mxu0 0
    %524 = vmatpush1.bf16.msra.mxu0 0
    %525 = vmatprep.subr.bf16.mxu0 0
    %526 = vmatpush1.bf16.msra.mxu0 0
    %527 = vmatprep.subr.bf16.mxu0 0
    %528 = vmatpush1.bf16.msra.mxu0 0
    %529 = vmatprep.subr.bf16.mxu0 0
    %530 = vmatpush1.bf16.msra.mxu0 0
    %531 = vmatprep.subr.bf16.mxu0 0
    %532 = vmatpush1.bf16.msra.mxu0 0
    %533 = vmatprep.subr.bf16.mxu0 0
    %534 = vmatpush1.bf16.msra.mxu0 0
    %535 = vmatprep.subr.bf16.mxu0 0
    %536 = vmatpush1.bf16.msra.mxu0 0
    %537 = vmatprep.subr.bf16.mxu0 0
    %538 = vmatpush1.bf16.msra.mxu0 0
    %539 = vmatprep.mubr.bf16.mxu0 0
    %540 = vmatmul.mubr.bf16.gmra.mrb[0].mxu0 %v288
    %v541 = vpop.f32.mrb[0].mxu0
    %v542 = vadd.f32 0.0, %v541
    %v543 = vpop.f32.mrb[0].mxu0
    %v544 = vpop.f32.mrb[0].mxu0
    %v545 = vpop.f32.mrb[0].mxu0
    %546 = vdwg.mxu0
    %v547 = vmul.f32 %v336, %v493
    %v548 = vmul.f32 %v341, %v494
    %550 = vrot.lane.b32.xlu0 %v548, 96
    %v551 = vpop.permute.xlu0 %550
    %v553 = vadd.f32 %v547, %v551
    %555 = vrot.lane.b32.xlu0 %v542, 96
    %v556 = vpop.permute.xlu0 %555
    %v558 = vadd.f32 %v553, %v556
    %v559 = vmax.f32 %v558, 0.0
    %v560 = vadd.f32 %v559, %v354
    %v561 = vpack.c.bf16 %v560, %v560
    %v562 = vld [vmem:[#allocation14] sm:$0xf]
    %v563 = vld [vmem:[#allocation14 + $0x4] sm:$0xf]
    %v564 = vld [vmem:[#allocation14 + $0x8] sm:$0xf]
    %v565 = vld [vmem:[#allocation14 + $0xc] sm:$0xf]
    %v566 = vld [vmem:[%s11] sm:$0xf]
    %v568 = vsel %vm160, %v566, 0
    %570 = vmatprep.subr.bf16.mxu0 0
    %571 = vmatpush1.bf16.msra.mxu0 %v568
    %572 = vmatprep.subr.bf16.mxu0 0
    %573 = vmatpush1.bf16.msra.mxu0 0
    %574 = vmatprep.subr.bf16.mxu0 0
    %575 = vmatpush1.bf16.msra.mxu0 0
    %576 = vmatprep.subr.bf16.mxu0 0
    %577 = vmatpush1.bf16.msra.mxu0 0
    %578 = vmatprep.subr.bf16.mxu0 0
    %579 = vmatpush1.bf16.msra.mxu0 0
    %580 = vmatprep.subr.bf16.mxu0 0
    %581 = vmatpush1.bf16.msra.mxu0 0
    %582 = vmatprep.subr.bf16.mxu0 0
    %583 = vmatpush1.bf16.msra.mxu0 0
    %584 = vmatprep.subr.bf16.mxu0 0
    %585 = vmatpush1.bf16.msra.mxu0 0
    %586 = vmatprep.subr.bf16.mxu0 0
    %587 = vmatpush1.bf16.msra.mxu0 0
    %588 = vmatprep.subr.bf16.mxu0 0
    %589 = vmatpush1.bf16.msra.mxu0 0
    %590 = vmatprep.subr.bf16.mxu0 0
    %591 = vmatpush1.bf16.msra.mxu0 0
    %592 = vmatprep.subr.bf16.mxu0 0
    %593 = vmatpush1.bf16.msra.mxu0 0
    %594 = vmatprep.subr.bf16.mxu0 0
    %595 = vmatpush1.bf16.msra.mxu0 0
    %596 = vmatprep.subr.bf16.mxu0 0
    %597 = vmatpush1.bf16.msra.mxu0 0
    %598 = vmatprep.subr.bf16.mxu0 0
    %599 = vmatpush1.bf16.msra.mxu0 0
    %600 = vmatprep.subr.bf16.mxu0 0
    %601 = vmatpush1.bf16.msra.mxu0 0
    %602 = vmatprep.mubr.bf16.mxu0 0
    %603 = vmatmul.mubr.bf16.gmra.mrb[0].mxu0 %v158
    %v604 = vpop.f32.mrb[0].mxu0
    %v605 = vadd.f32 0.0, %v604
    %v606 = vpop.f32.mrb[0].mxu0
    %v607 = vpop.f32.mrb[0].mxu0
    %v608 = vpop.f32.mrb[0].mxu0
    %609 = vdwg.mxu0
    %611 = vrot.lane.b32.xlu0 %v561, 32
    %v612 = vpop.permute.xlu0 %611
    %v617 = vunpack.c.l.b16 %v562
    %v618 = vunpack.c.l.b16 %v563
    %v619 = vunpack.c.l.b16 %v564
    %v620 = vunpack.c.l.b16 %v565
    %v621 = vpack.c.b16 %v618, %v617
    %v622 = vpack.c.b16 %v620, %v619
    %v626 = vsel %vm436, %v612, 0
    %628 = vmatprep.subr.bf16.mxu0 0
    %629 = vmatpush1.bf16.msra.mxu0 %v621
    %630 = vmatprep.subr.bf16.mxu0 0
    %631 = vmatpush1.bf16.msra.mxu0 %v622
    %632 = vmatprep.subr.bf16.mxu0 0
    %633 = vmatpush1.bf16.msra.mxu0 0
    %634 = vmatprep.subr.bf16.mxu0 0
    %635 = vmatpush1.bf16.msra.mxu0 0
    %636 = vmatprep.subr.bf16.mxu0 0
    %637 = vmatpush1.bf16.msra.mxu0 0
    %638 = vmatprep.subr.bf16.mxu0 0
    %639 = vmatpush1.bf16.msra.mxu0 0
    %640 = vmatprep.subr.bf16.mxu0 0
    %641 = vmatpush1.bf16.msra.mxu0 0
    %642 = vmatprep.subr.bf16.mxu0 0
    %643 = vmatpush1.bf16.msra.mxu0 0
    %644 = vmatprep.subr.bf16.mxu0 0
    %645 = vmatpush1.bf16.msra.mxu0 0
    %646 = vmatprep.subr.bf16.mxu0 0
    %647 = vmatpush1.bf16.msra.mxu0 0
    %648 = vmatprep.subr.bf16.mxu0 0
    %649 = vmatpush1.bf16.msra.mxu0 0
    %650 = vmatprep.subr.bf16.mxu0 0
    %651 = vmatpush1.bf16.msra.mxu0 0
    %652 = vmatprep.subr.bf16.mxu0 0
    %653 = vmatpush1.bf16.msra.mxu0 0
    %654 = vmatprep.subr.bf16.mxu0 0
    %655 = vmatpush1.bf16.msra.mxu0 0
    %656 = vmatprep.subr.bf16.mxu0 0
    %657 = vmatpush1.bf16.msra.mxu0 0
    %658 = vmatprep.subr.bf16.mxu0 0
    %659 = vmatpush1.bf16.msra.mxu0 0
    %660 = vmatprep.mubr.bf16.mxu0 0
    %661 = vmatmul.mubr.bf16.gmra.mrb[0].mxu0 %v626
    %v662 = vpop.f32.mrb[0].mxu0
    %v663 = vadd.f32 %v605, %v662
    %v664 = vpop.f32.mrb[0].mxu0
    %v665 = vpop.f32.mrb[0].mxu0
    %v666 = vpop.f32.mrb[0].mxu0
    %667 = vdwg.mxu0
    %v668 = vld [vmem:[%s12] sm:$0x1]
    %v670 = vlaneseq
    %v671 = vshrl.u32 %v670, 7
    %v672 = vsub.s32 0, %v671
    %v673 = vrot.slane %v668, %v672
    %v675 = vadd.f32 %v663, %v673
    %677 = vrot.lane.b32.xlu0 %v675, 120
    %v678 = vpop.permute.xlu0 %677
    %680 = vrot.lane.b32.xlu0 %v675, 112
    %v681 = vpop.permute.xlu0 %680
    %v683 = vpack.c.bf16 %v678, %v675
    %v684 = vpack.c.bf16 %v681, %v681
    %v686 = vsel %vm160, %v684, 0
    %688 = vmatprep.subr.bf16.mxu0 0
    %689 = vmatpush1.bf16.msra.mxu0 %v683
    %690 = vmatprep.subr.bf16.mxu0 0
    %691 = vmatpush1.bf16.msra.mxu0 %v686
    %692 = vmatprep.subr.bf16.mxu0 0
    %693 = vmatpush1.bf16.msra.mxu0 0
    %694 = vmatprep.subr.bf16.mxu0 0
    %695 = vmatpush1.bf16.msra.mxu0 0
    %696 = vmatprep.subr.bf16.mxu0 0
    %697 = vmatpush1.bf16.msra.mxu0 0
    %698 = vmatprep.subr.bf16.mxu0 0
    %699 = vmatpush1.bf16.msra.mxu0 0
    %700 = vmatprep.subr.bf16.mxu0 0
    %701 = vmatpush1.bf16.msra.mxu0 0
    %702 = vmatprep.subr.bf16.mxu0 0
    %703 = vmatpush1.bf16.msra.mxu0 0
    %704 = vmatprep.subr.bf16.mxu0 0
    %705 = vmatpush1.bf16.msra.mxu0 0
    %706 = vmatprep.subr.bf16.mxu0 0
    %707 = vmatpush1.bf16.msra.mxu0 0
    %708 = vmatprep.subr.bf16.mxu0 0
    %709 = vmatpush1.bf16.msra.mxu0 0
    %710 = vmatprep.subr.bf16.mxu0 0
    %711 = vmatpush1.bf16.msra.mxu0 0
    %712 = vmatprep.subr.bf16.mxu0 0
    %713 = vmatpush1.bf16.msra.mxu0 0
    %714 = vmatprep.subr.bf16.mxu0 0
    %715 = vmatpush1.bf16.msra.mxu0 0
    %716 = vmatprep.subr.bf16.mxu0 0
    %717 = vmatpush1.bf16.msra.mxu0 0
    %718 = vmatprep.subr.bf16.mxu0 0
    %719 = vmatpush1.bf16.msra.mxu0 0
    %720 = vmatprep.mubr.bf16.mxu0 0
    %721 = vmatmul.mubr.bf16.gmra.mrb[0].mxu0 %v288
    %v722 = vpop.f32.mrb[0].mxu0
    %v723 = vadd.f32 0.0, %v722
    %v724 = vpop.f32.mrb[0].mxu0
    %v725 = vpop.f32.mrb[0].mxu0
    %v726 = vpop.f32.mrb[0].mxu0
    %727 = vdwg.mxu0
    %v728 = vmul.f32 %v336, %v675
    %v729 = vmul.f32 %v341, %v675
    %731 = vrot.lane.b32.xlu0 %v729, 120
    %v732 = vpop.permute.xlu0 %731
    %v734 = vadd.f32 %v728, %v732
    %736 = vrot.lane.b32.xlu0 %v723, 24
    %v737 = vpop.permute.xlu0 %736
    %v739 = vadd.f32 %v734, %v737
    %v740 = vmax.f32 %v739, 0.0
    %742 = vrot.lane.b32.xlu0 %v740, 104
    %v743 = vpop.permute.xlu0 %742
    %745 = vst.msk [vmem:[#allocation16] sm:$0xff] %vm156, %v743
    // Predicated region
    $region86: #{tpu_custom_call.1} parent=1 // pred_check
      _
    $region87: #{tpu_custom_call.1} parent=1 // pred_check_branch
      %747 = sbr.rel (0) target = $region89
    $region88: #{tpu_custom_call.1} parent=1 // pred_region
      %s749 = ssub.s32 128, 128
      %750 = vsyncadd [#allocation4], %s749
      %s752 = sshll.u32 [#allocation16], 4
      %s753 = int_to_ptr.vmem [resolvable:$true] %s752
      %755 = dma.vmem_to_hbm [thread:$0]  %s753, 128, %s13, [#allocation4]
    $region89: #{tpu_custom_call.1} parent=1 // pred_fallthru
      _
    // Predicated region
    $region90: #{tpu_custom_call.1} parent=1 // pred_check
      _
    $region91: #{tpu_custom_call.1} parent=1 // pred_check_branch
      %757 = sbr.rel (0) target = $region93
    $region92: #{tpu_custom_call.1} parent=1 // pred_region
      %758 = dma.done [#allocation4], 128
    $region93: #{tpu_custom_call.1} parent=1 // pred_fallthru
      _
    %759 = vsyncpa [#allocation3], 1
    %760 = vsyncpa [#allocation6], 1
    %761 = vsyncpa [#allocation9], 1
    %762 = vsyncpa [#allocation12], 1
    %763 = vsyncpa [#allocation15], 1
    %764 = vsyncpa [#allocation4], 1

</llo_original>
